<compile_context>
chip_gen: v7x
topology: tpu7x:2x2x1
jax: 0.10.0
libtpu: 0.0.40
codegen_flags: <defaults>
</compile_context>

<pallas_src>
import functools

import jax
import jax.numpy as jnp
from jax.experimental import pallas as pl
from jax.experimental.pallas import tpu as pltpu

_F32_MIN_NORMAL = 1.17549435e-38


def _cdiv(a, b):
    return -(-a // b)


# ---------------------------------------------------------------------------
# Kernels
# ---------------------------------------------------------------------------
def _absmax_kernel(x_ref, o_ref, acc_ref, *, block_rows, inner_steps,
                   rows_valid, ragged):
    """Running max(|x|) over a (nslices, inner_steps) grid of row blocks.

    acc_ref is a tiny (1, lane) accumulator: per step one sublane max-reduce
    of the block plus a single vmax into the accumulator -- no block-sized
    accumulator load/store, so the pass stays HBM-bound on every generation.
    Each parallel slice writes its partial max (splat to an (8,128) tile);
    the wrapper combines slices with a scalar jnp.max."""
    s = pl.program_id(0)          # parallel slice (sharded across TCs on v7x)
    k = pl.program_id(1)          # serial reduction step within the slice

    @pl.when(k == 0)
    def _():
        acc_ref[...] = jnp.zeros_like(acc_ref)

    a = jnp.abs(x_ref[...].astype(jnp.float32))
    if ragged:
        # The last row-block extends past the array; OOB rows hold garbage.
        blk = s * inner_steps + k
        row = blk * block_rows + jax.lax.broadcasted_iota(jnp.int32, a.shape, 0)
        a = jnp.where(row < rows_valid, a, 0.0)

    acc_ref[...] = jnp.maximum(acc_ref[...], jnp.max(a, axis=0, keepdims=True))

    @pl.when(k == pl.num_programs(1) - 1)
    def _():
        m = jnp.max(acc_ref[...], keepdims=True)           # (1, 1)
        o_ref[...] = jnp.broadcast_to(m, o_ref.shape)      # per-slice partial


def _quant_kernel(sc_ref, x_ref, o_ref, *, N):
    """Elementwise symmetric fake-quantization; scalars live in SMEM."""
    q = jnp.float32(2 ** (N - 1) - 1)
    scale = sc_ref[0]     # range / q (may be 0)
    inv = sc_ref[1]       # 1 / max(scale, FLT_MIN_NORMAL)  (always finite)
    ok = sc_ref[2]        # 1.0 if range > 0 else 0.0
    x = x_ref[...].astype(jnp.float32)
    xq = jnp.clip(jnp.round(x * inv), -q, q) * scale
    # range == 0 -> identity (uncalibrated range); one cheap select per vreg.
    o_ref[...] = jnp.where(ok > 0.0, xq, x).astype(o_ref.dtype)


# ---------------------------------------------------------------------------
# Trace-time planning + pallas_call wrappers
# ---------------------------------------------------------------------------
def _plan(shape, dtype):
    """Lane width, rows, pad, per-generation block size and VMEM limit."""
    total = 1
    for d in shape:
        total *= int(d)
    total = max(total, 1)
    itemsize = jnp.dtype(dtype).itemsize

    lane = None
    for cand in (1024, 512, 256, 128):
        if total % cand == 0:
            lane = cand
            break
    if lane is None:                       # rare fallback: one pad copy
        lane = 128
    pad = (-total) % lane
    rows = (total + pad) // lane

    # Per-generation block sizing: 8 MiB blocks on 128 MiB-VMEM chips
    # (v5e/v6e), conservative 4 MiB blocks on v7x (64 MiB VMEM).
    try:
        vmem_cap = pltpu.get_tpu_info().vmem_capacity_bytes
    except Exception:
        vmem_cap = 64 * 1024 * 1024
    if vmem_cap >= 100 * 1024 * 1024:
        block_bytes, vmem_limit = 8 << 20, 64 << 20
    else:
        block_bytes, vmem_limit = 4 << 20, 32 << 20

    max_rows = max(8, (block_bytes // (lane * itemsize)) // 8 * 8)
    block_rows = rows if rows <= max_rows else max_rows
    return total, pad, lane, rows, block_rows, vmem_limit


def pallas_absmax(x2d, block_rows, vmem_limit):
    rows, lane = x2d.shape
    steps = _cdiv(rows, block_rows)
    # Two parallel slices when cleanly splittable (v7x uses both TCs);
    # otherwise a single serial reduction (always correct).
    nslices = 2 if (steps >= 2 and steps % 2 == 0) else 1
    inner = steps // nslices
    ragged = (rows % block_rows) != 0

    kern = functools.partial(_absmax_kernel, block_rows=block_rows,
                             inner_steps=inner, rows_valid=rows, ragged=ragged)
    partial_max = pl.pallas_call(
        kern,
        out_shape=jax.ShapeDtypeStruct((8 * nslices, 128), jnp.float32),
        grid=(nslices, inner),
        in_specs=[pl.BlockSpec((block_rows, lane),
                               lambda s, k: (s * inner + k, 0))],
        out_specs=pl.BlockSpec((8, 128), lambda s, k: (s, 0)),
        scratch_shapes=[pltpu.VMEM((1, lane), jnp.float32)],
        compiler_params=pltpu.CompilerParams(
            dimension_semantics=("parallel", "arbitrary"),
            vmem_limit_bytes=vmem_limit),
    )(x2d)
    return jnp.max(partial_max)


def pallas_fake_quant(x2d, scalars, N, block_rows, vmem_limit):
    rows, lane = x2d.shape
    steps = _cdiv(rows, block_rows)
    return pl.pallas_call(
        functools.partial(_quant_kernel, N=N),
        out_shape=jax.ShapeDtypeStruct((rows, lane), x2d.dtype),
        grid=(steps,),
        in_specs=[
            pl.BlockSpec(memory_space=pltpu.MemorySpace.SMEM),   # [scale, inv, ok]
            pl.BlockSpec((block_rows, lane), lambda i: (i, 0)),
        ],
        out_specs=pl.BlockSpec((block_rows, lane), lambda i: (i, 0)),
        compiler_params=pltpu.CompilerParams(
            dimension_semantics=("parallel",),
            vmem_limit_bytes=vmem_limit),
    )(scalars, x2d)


# ---------------------------------------------------------------------------
# Functional forward (one jitted program) + thin stateful module wrapper
# ---------------------------------------------------------------------------
@functools.partial(jax.jit,
                   static_argnames=("N", "running", "training", "momentum"))
def quant_forward(x, running_range, *, N, running, training, momentum):
    total, pad, lane, rows, block_rows, vmem_limit = _plan(x.shape, x.dtype)

    flat = x.reshape(-1)
    if pad:                                # rare: element count not % 128
        flat = jnp.pad(flat, (0, pad))
    x2d = flat.reshape(rows, lane)         # free reshape on the common path

    new_running_range = running_range
    if running:
        if training:
            cur = pallas_absmax(x2d, block_rows, vmem_limit)
            rr = running_range[0]
            new_rr = jnp.where(rr == 0.0, cur,
                               rr * momentum + cur * (1.0 - momentum))
            new_running_range = new_rr.reshape(1).astype(jnp.float32)
            rng = new_rr
        else:
            rng = running_range[0]
    else:
        # non-running mode: quantize against the current batch abs-max
        rng = pallas_absmax(x2d, block_rows, vmem_limit)

    # Launch-time scalars (one SMEM read each inside the kernel).
    q = jnp.float32(2 ** (N - 1) - 1)
    scale = rng.astype(jnp.float32) / q
    inv = 1.0 / jnp.maximum(scale, jnp.float32(_F32_MIN_NORMAL))  # finite
    ok = (scale > 0.0).astype(jnp.float32)
    scalars = jnp.stack([scale, inv, ok])

    y2d = pallas_fake_quant(x2d, scalars, N, block_rows, vmem_limit)
    y = y2d.reshape(-1)
    if pad:
        y = y[:total]
    return y.reshape(x.shape), new_running_range


class Quant:
    """JAX mirror of the PyTorch module.  Forward is a single jitted program;
    running_range is a concrete device array updated eagerly.  (Do not call
    this stateful wrapper from inside an outer jax.jit -- use quant_forward.)"""

    def __init__(self, N, running=True):
        self.N = N
        self.running = running
        self.momentum = 0.9
        self.training = True
        self.running_range = jnp.zeros((1,), jnp.float32)   # buffer

    def __call__(self, x):
        y, new_rr = quant_forward(
            x, self.running_range, N=self.N, running=self.running,
            training=self.training, momentum=self.momentum)
        if self.running and self.training:
            self.running_range = new_rr
        return y


if __name__ == "__main__":
    q = float(2 ** (8 - 1) - 1)

    def ref_quant(xx, rr_scalar):
        # Mirrors the kernel math exactly (same f32 scalar ops).
        scale = rr_scalar.astype(jnp.float32) / jnp.float32(q)
        inv = 1.0 / jnp.maximum(scale, jnp.float32(_F32_MIN_NORMAL))
        return jnp.clip(jnp.round(xx * inv), -q, q) * scale

    x = jax.random.normal(jax.random.PRNGKey(0), (2, 4, 16, 16), jnp.float32)
    mod = Quant(N=8, running=True)
    mod.training = True

    # first call: running_range was 0 -> becomes max|x|
    y = jax.block_until_ready(mod(x))
    assert y.shape == x.shape and y.dtype == x.dtype
    rr = mod.running_range[0]
    assert abs(float(rr) - float(jnp.max(jnp.abs(x)))) < 1e-6
    assert jnp.allclose(y, ref_quant(x, rr), atol=1e-6), "mismatch vs reference"

    # second call: exercises the EMA (running_range != 0) path
    x2 = jax.random.normal(jax.random.PRNGKey(1), (2, 4, 16, 16), jnp.float32)
    y2 = jax.block_until_ready(mod(x2))
    rr2 = mod.running_range[0]
    rr2_ref = float(rr) * 0.9 + float(jnp.max(jnp.abs(x2))) * 0.1
    assert abs(float(rr2) - rr2_ref) < 1e-4
    assert jnp.allclose(y2, ref_quant(x2, rr2), atol=1e-6), "EMA-path mismatch"

    print("KERNEL_OK")
</pallas_src>

<mosaic_0001>
module attributes {stable_mosaic.version = 11 : i64} {
  func.func @_absmax_kernel(%arg0: i32, %arg1: i32, %arg2: memref<2x1024xf32, #tpu.memory_space<vmem>>, %arg3: memref<8x128xf32, #tpu.memory_space<vmem>>, %arg4: memref<1x1024xf32, #tpu.memory_space<vmem>>) attributes {dimension_semantics = [#tpu.dimension_semantics<parallel>, #tpu.dimension_semantics<arbitrary>], iteration_bounds = array<i64: 1, 1>, scalar_prefetch = 0 : i64, scratch_operands = 1 : i64, tpu.core_type = #tpu.core_type<tc>, window_params = [{transform_indices = @transform_0, window_bounds = array<i64: 2, 1024>}, {transform_indices = @transform_1, window_bounds = array<i64: 8, 128>}]} {
    %c0_i32 = arith.constant 0 : i32
    %0 = arith.cmpi eq, %arg1, %c0_i32 : i32
    %1 = arith.extui %0 : i1 to i32
    %c0_i32_0 = arith.constant 0 : i32
    %2 = arith.cmpi ne, %1, %c0_i32_0 : i32
    scf.if %2 {
      %cst_8 = arith.constant 0.000000e+00 : f32
      %13 = vector.broadcast %cst_8 : f32 to vector<1x1024xf32>
      %c0_9 = arith.constant 0 : index
      %c0_10 = arith.constant 0 : index
      %14 = vector.load %arg4[%c0_9, %c0_10] : memref<1x1024xf32, #tpu.memory_space<vmem>>, vector<1x1024xf32>
      tpu.vector_store %arg4[%c0_9, %c0_10], %13 {strides = array<i32>} : memref<1x1024xf32, #tpu.memory_space<vmem>>, vector<1x1024xf32>,
    } else {
    }
    %c0 = arith.constant 0 : index
    %c0_1 = arith.constant 0 : index
    %3 = vector.load %arg2[%c0, %c0_1] : memref<2x1024xf32, #tpu.memory_space<vmem>>, vector<2x1024xf32>
    %4 = math.absf %3 : vector<2x1024xf32>
    %c0_2 = arith.constant 0 : index
    %c0_3 = arith.constant 0 : index
    %5 = vector.load %arg4[%c0_2, %c0_3] : memref<1x1024xf32, #tpu.memory_space<vmem>>, vector<1x1024xf32>
    %cst = arith.constant dense<0xFF800000> : vector<1024xf32>
    %6 = vector.multi_reduction <maximumf>, %4, %cst [0] : vector<2x1024xf32> to vector<1024xf32>
    %7 = vector.shape_cast %6 : vector<1024xf32> to vector<1x1024xf32>
    %8 = arith.maximumf %5, %7 : vector<1x1024xf32>
    %c0_4 = arith.constant 0 : index
    %c0_5 = arith.constant 0 : index
    %9 = vector.load %arg4[%c0_4, %c0_5] : memref<1x1024xf32, #tpu.memory_space<vmem>>, vector<1x1024xf32>
    tpu.vector_store %arg4[%c0_4, %c0_5], %8 {strides = array<i32>} : memref<1x1024xf32, #tpu.memory_space<vmem>>, vector<1x1024xf32>,
    %c0_i32_6 = arith.constant 0 : i32
    %10 = arith.cmpi eq, %arg1, %c0_i32_6 : i32
    %11 = arith.extui %10 : i1 to i32
    %c0_i32_7 = arith.constant 0 : i32
    %12 = arith.cmpi ne, %11, %c0_i32_7 : i32
    scf.if %12 {
      %c0_8 = arith.constant 0 : index
      %c0_9 = arith.constant 0 : index
      %13 = vector.load %arg4[%c0_8, %c0_9] : memref<1x1024xf32, #tpu.memory_space<vmem>>, vector<1x1024xf32>
      %14 = vector.shape_cast %13 : vector<1x1024xf32> to vector<1x1x1024xf32>
      %cst_10 = arith.constant dense<0xFF800000> : vector<1xf32>
      %15 = vector.multi_reduction <maximumf>, %14, %cst_10 [1, 2] : vector<1x1x1024xf32> to vector<1xf32>
      %16 = vector.shape_cast %15 : vector<1xf32> to vector<1x1x1xf32>
      %17 = vector.extract %16[0, 0, 0] : f32 from vector<1x1x1xf32>
      %18 = vector.broadcast %17 : f32 to vector<1x1xf32>
      %19 = vector.shape_cast %18 : vector<1x1xf32> to vector<1x1xf32>
      %20 = vector.broadcast %19 : vector<1x1xf32> to vector<8x128xf32>
      %c0_11 = arith.constant 0 : index
      %c0_12 = arith.constant 0 : index
      %21 = vector.load %arg3[%c0_11, %c0_12] : memref<8x128xf32, #tpu.memory_space<vmem>>, vector<8x128xf32>
      tpu.vector_store %arg3[%c0_11, %c0_12], %20 {strides = array<i32>} : memref<8x128xf32, #tpu.memory_space<vmem>>, vector<8x128xf32>,
    } else {
    }
    return
  }
  func.func @transform_0(%arg0: i32, %arg1: i32) -> (i32, i32) {
    %c1_i32 = arith.constant 1 : i32
    %0 = arith.muli %arg0, %c1_i32 : i32
    %1 = arith.addi %0, %arg1 : i32
    %c0_i32 = arith.constant 0 : i32
    %c0_i32_0 = arith.constant 0 : i32
    return %1, %c0_i32 : i32, i32
  }
  func.func @transform_1(%arg0: i32, %arg1: i32) -> (i32, i32) {
    %c0_i32 = arith.constant 0 : i32
    %c0_i32_0 = arith.constant 0 : i32
    return %arg0, %c0_i32 : i32, i32
  }
}

module attributes {stable_mosaic.version = 11 : i64} {
  func.func @_quant_kernel(%arg0: i32, %arg1: memref<3xf32, #tpu.memory_space<smem>>, %arg2: memref<2x1024xf32, #tpu.memory_space<vmem>>, %arg3: memref<2x1024xf32, #tpu.memory_space<vmem>>) attributes {dimension_semantics = [#tpu.dimension_semantics<parallel>], iteration_bounds = array<i64: 1>, scalar_prefetch = 0 : i64, scratch_operands = 0 : i64, tpu.core_type = #tpu.core_type<tc>, window_params = [{transform_indices = @transform_0, window_bounds = array<i64: 3>}, {transform_indices = @transform_1, window_bounds = array<i64: 2, 1024>}, {transform_indices = @transform_2, window_bounds = array<i64: 2, 1024>}]} {
    %c0 = arith.constant 0 : index
    %0 = memref.load %arg1[%c0] : memref<3xf32, #tpu.memory_space<smem>>
    %c1 = arith.constant 1 : index
    %1 = memref.load %arg1[%c1] : memref<3xf32, #tpu.memory_space<smem>>
    %c2 = arith.constant 2 : index
    %2 = memref.load %arg1[%c2] : memref<3xf32, #tpu.memory_space<smem>>
    %c0_0 = arith.constant 0 : index
    %c0_1 = arith.constant 0 : index
    %3 = vector.load %arg2[%c0_0, %c0_1] : memref<2x1024xf32, #tpu.memory_space<vmem>>, vector<2x1024xf32>
    %4 = vector.broadcast %1 : f32 to vector<2x1024xf32>
    %5 = arith.mulf %3, %4 : vector<2x1024xf32>
    %6 = math.roundeven %5 : vector<2x1024xf32>
    %cst = arith.constant 0.000000e+00 : f32
    %cst_2 = arith.constant 1.270000e+02 : f32
    %7 = arith.subf %cst, %cst_2 : f32
    %cst_3 = arith.constant 1.270000e+02 : f32
    %8 = vector.broadcast %7 : f32 to vector<2x1024xf32>
    %9 = arith.maximumf %8, %6 : vector<2x1024xf32>
    %10 = vector.broadcast %cst_3 : f32 to vector<2x1024xf32>
    %11 = arith.minimumf %10, %9 : vector<2x1024xf32>
    %12 = vector.broadcast %0 : f32 to vector<2x1024xf32>
    %13 = arith.mulf %11, %12 : vector<2x1024xf32>
    %cst_4 = arith.constant 0.000000e+00 : f32
    %14 = arith.cmpf ogt, %2, %cst_4 : f32
    %15 = arith.select %14, %13, %3 : vector<2x1024xf32>
    %c0_5 = arith.constant 0 : index
    %c0_6 = arith.constant 0 : index
    %16 = vector.load %arg3[%c0_5, %c0_6] : memref<2x1024xf32, #tpu.memory_space<vmem>>, vector<2x1024xf32>
    tpu.vector_store %arg3[%c0_5, %c0_6], %15 {strides = array<i32>} : memref<2x1024xf32, #tpu.memory_space<vmem>>, vector<2x1024xf32>,
    return
  }
  func.func @transform_0(%arg0: i32) -> i32 {
    %c0_i32 = arith.constant 0 : i32
    %c0_i32_0 = arith.constant 0 : i32
    return %c0_i32 : i32
  }
  func.func @transform_1(%arg0: i32) -> (i32, i32) {
    %c0_i32 = arith.constant 0 : i32
    %c0_i32_0 = arith.constant 0 : i32
    return %arg0, %c0_i32 : i32, i32
  }
  func.func @transform_2(%arg0: i32) -> (i32, i32) {
    %c0_i32 = arith.constant 0 : i32
    %c0_i32_0 = arith.constant 0 : i32
    return %arg0, %c0_i32 : i32, i32
  }
}

</mosaic_0001>

<llo_original>
// kernel: quant_forward.2
$region0: #{quant_forward.2}
  #allocation0 [shape = 'u32[]', space=smem, size = 0x4, offset = 0x4, fixed_abs, tag = 'smem constant byte address 0x4 - core index']
  #allocation1 [shape = 'u32[144,128]{1,0:T(1,128)}', space=vmem, size = 0x12000, scoped, tag = 'internal scratch']
  #allocation2 [shape = 'f32[1,1024]{1,0:T(1,128)}', space=vmem, size = 0x1000, scoped, tag = 'scratch operand']
  %s0 = inlined_call_operand.vmem [shape: f32[2,1024], index: 0, kind: input, shape index: {}]
  %s1 = inlined_call_operand.vmem [shape: f32[8,128], index: 1, kind: output, shape index: {}]
  %s2 = sld [smem:[#allocation0]]
  $region22: #{quant_forward.2} parent=0
    _
  %s4 = ssub.s32 1, %s2
  %s5 = scalar_select 0, %s4, %s2
  // Predicated region
  $region2: #{quant_forward.2} parent=0 // pred_check
    _
  $region3: #{quant_forward.2} parent=0 // pred_check_branch
    %7 = sbr.rel (0) target = $region5
  $region4: #{quant_forward.2} parent=0 // pred_region
    %s8 = sadd.s32 0, 0
    %p9 = scmp.lt.s32.totalorder %s8, 0
    %s10 = scalar_select %p9, %s8, 0
    %s11 = smul.addr %s10, 8
    %s12 = smul.addr %s11, 2
    %s13 = scalar_lea.vmem %s0, %s12
    %s14 = sadd.s32 0, 0
  $region5: #{quant_forward.2} parent=0 // pred_fallthru
    _
  %s15 = sadd.s32 0, 0
  %p16 = scmp.lt.s32.totalorder %s15, 0
  %s17 = scalar_select %p16, %s15, 0
  %s18 = smul.addr %s17, 8
  %s19 = smul.addr %s18, 2
  %s20 = scalar_lea.vmem %s0, %s19
  %s21 = sadd.s32 0, 0
  %p22 = scmp.lt.s32.totalorder %s21, 0
  %s23 = scalar_select %p22, %s21, 0
  %s24 = smul.addr %s23, 8
  %s25 = smul.addr %s24, 2
  %s26 = scalar_lea.vmem %s0, %s25
  %s27 = sadd.s32 0, 0
  %p28 = scmp.eq.s32.totalorder 0, 0
  // Predicated region
  $region6: #{quant_forward.2} parent=0 // pred_check
    %p29 = pneg %p28
  $region7: #{quant_forward.2} parent=0 // pred_check_branch
    %31 = sbr.rel (%p29) target = $region9
  $region8: #{quant_forward.2} parent=0 // pred_region
    %32 = vst [vmem:[#allocation2] sm:$0xff] 0.0
  $region9: #{quant_forward.2} parent=0 // pred_fallthru
    _
  %v33 = vld [vmem:[%s26] sm:$0xff]
  %v34 = vld [vmem:[%s26 + $0x8] sm:$0xff]
  %v35 = vand.u32 2147483647, %v33
  %v36 = vand.u32 2147483647, %v34
  %v37 = vld [vmem:[#allocation2] sm:$0xff]
  %v40 = vcombine.high %v35, %v35
  %v42 = vunpack.c.l.s4 1983009808
  %v43 = vunpack.c.0.s8 %v42
  %v44 = vlaneseq
  %v45 = vshrl.u32 %v44, 7
  %v46 = vsub.s32 %v43, %v45
  %v47 = vrot.slane %v35, %v46
  %v49 = vunpack.c.l.s4 1983009808
  %v50 = vunpack.c.0.s8 %v49
  %v51 = vlaneseq
  %v52 = vshrl.u32 %v51, 7
  %v53 = vsub.s32 %v50, %v52
  %v54 = vrot.slane %v40, %v53
  %v55 = vcombine.high %v47, %v47
  %v56 = vcombine.high %v54, %v54
  %v57 = vcombine.high %v36, %v36
  %v59 = vunpack.c.l.s4 1983009808
  %v60 = vunpack.c.0.s8 %v59
  %v61 = vlaneseq
  %v62 = vshrl.u32 %v61, 7
  %v63 = vsub.s32 %v60, %v62
  %v64 = vrot.slane %v36, %v63
  %v66 = vunpack.c.l.s4 1983009808
  %v67 = vunpack.c.0.s8 %v66
  %v68 = vlaneseq
  %v69 = vshrl.u32 %v68, 7
  %v70 = vsub.s32 %v67, %v69
  %v71 = vrot.slane %v57, %v70
  %v72 = vcombine.high %v64, %v64
  %v73 = vcombine.high %v71, %v71
  %vm82 = vcmask 1041408
  %v83 = vsel %vm82, %v47, -inf
  %v84 = vrot.slane %v83, 4
  %v85 = vmax.f32 %v83, %v84
  %v86 = vrot.slane %v85, 2
  %v87 = vmax.f32 %v85, %v86
  %v88 = vrot.slane %v87, 1
  %v89 = vmax.f32 %v87, %v88
  %v90 = vsel %vm82, %v55, -inf
  %v91 = vrot.slane %v90, 4
  %v92 = vmax.f32 %v90, %v91
  %v93 = vrot.slane %v92, 2
  %v94 = vmax.f32 %v92, %v93
  %v95 = vrot.slane %v94, 1
  %v96 = vmax.f32 %v94, %v95
  %v97 = vsel %vm82, %v54, -inf
  %v98 = vrot.slane %v97, 4
  %v99 = vmax.f32 %v97, %v98
  %v100 = vrot.slane %v99, 2
  %v101 = vmax.f32 %v99, %v100
  %v102 = vrot.slane %v101, 1
  %v103 = vmax.f32 %v101, %v102
  %v104 = vsel %vm82, %v56, -inf
  %v105 = vrot.slane %v104, 4
  %v106 = vmax.f32 %v104, %v105
  %v107 = vrot.slane %v106, 2
  %v108 = vmax.f32 %v106, %v107
  %v109 = vrot.slane %v108, 1
  %v110 = vmax.f32 %v108, %v109
  %v111 = vsel %vm82, %v64, -inf
  %v112 = vrot.slane %v111, 4
  %v113 = vmax.f32 %v111, %v112
  %v114 = vrot.slane %v113, 2
  %v115 = vmax.f32 %v113, %v114
  %v116 = vrot.slane %v115, 1
  %v117 = vmax.f32 %v115, %v116
  %v118 = vsel %vm82, %v72, -inf
  %v119 = vrot.slane %v118, 4
  %v120 = vmax.f32 %v118, %v119
  %v121 = vrot.slane %v120, 2
  %v122 = vmax.f32 %v120, %v121
  %v123 = vrot.slane %v122, 1
  %v124 = vmax.f32 %v122, %v123
  %v125 = vsel %vm82, %v71, -inf
  %v126 = vrot.slane %v125, 4
  %v127 = vmax.f32 %v125, %v126
  %v128 = vrot.slane %v127, 2
  %v129 = vmax.f32 %v127, %v128
  %v130 = vrot.slane %v129, 1
  %v131 = vmax.f32 %v129, %v130
  %v132 = vsel %vm82, %v73, -inf
  %v133 = vrot.slane %v132, 4
  %v134 = vmax.f32 %v132, %v133
  %v135 = vrot.slane %v134, 2
  %v136 = vmax.f32 %v134, %v135
  %v137 = vrot.slane %v136, 1
  %v138 = vmax.f32 %v136, %v137
  %v147 = vcombine.low %v89, %v96
  %v148 = vcombine.low %v103, %v110
  %v149 = vcombine.low %v117, %v124
  %v150 = vcombine.low %v131, %v138
  %v152 = vunpack.c.l.s4 1966171168
  %v153 = vunpack.c.0.s8 %v152
  %v154 = vlaneseq
  %v155 = vshrl.u32 %v154, 7
  %v156 = vsub.s32 %v153, %v155
  %v157 = vrot.slane %v147, %v156
  %v159 = vunpack.c.l.s4 1966171168
  %v160 = vunpack.c.0.s8 %v159
  %v161 = vlaneseq
  %v162 = vshrl.u32 %v161, 7
  %v163 = vsub.s32 %v160, %v162
  %v164 = vrot.slane %v148, %v163
  %v166 = vunpack.c.l.s4 1966171168
  %v167 = vunpack.c.0.s8 %v166
  %v168 = vlaneseq
  %v169 = vshrl.u32 %v168, 7
  %v170 = vsub.s32 %v167, %v169
  %v171 = vrot.slane %v149, %v170
  %v173 = vunpack.c.l.s4 1966171168
  %v174 = vunpack.c.0.s8 %v173
  %v175 = vlaneseq
  %v176 = vshrl.u32 %v175, 7
  %v177 = vsub.s32 %v174, %v176
  %v178 = vrot.slane %v150, %v177
  %v179 = vcombine.low %v157, %v164
  %v180 = vcombine.low %v171, %v178
  %v182 = vunpack.c.l.s4 1966171168
  %v183 = vunpack.c.0.s8 %v182
  %v184 = vlaneseq
  %v185 = vshrl.u32 %v184, 7
  %v186 = vsub.s32 %v183, %v185
  %v187 = vrot.slane %v179, %v186
  %v189 = vunpack.c.l.s4 1966171168
  %v190 = vunpack.c.0.s8 %v189
  %v191 = vlaneseq
  %v192 = vshrl.u32 %v191, 7
  %v193 = vsub.s32 %v190, %v192
  %v194 = vrot.slane %v180, %v193
  %v195 = vcombine.low %v187, %v194
  %v197 = vmax.f32 %v37, %v195
  %198 = vst [vmem:[#allocation2] sm:$0xff] %v197
  // Predicated region
  $region10: #{quant_forward.2} parent=0 // pred_check
    %p199 = pneg %p28
  $region11: #{quant_forward.2} parent=0 // pred_check_branch
    %201 = sbr.rel (%p199) target = $region13
  $region12: #{quant_forward.2} parent=0 // pred_region
    %v202 = vld [vmem:[#allocation2] sm:$0xff]
    %v204 = vlaneseq
    %v205 = vshrl.u32 %v204, 7
    %v206 = vsub.s32 0, %v205
    %v207 = vrot.slane %v202, %v206
    %v208 = vlaneseq
    %v209 = vshrl.u32 %v208, 7
    %v210 = vsub.s32 1, %v209
    %v211 = vrot.slane %v202, %v210
    %v212 = vlaneseq
    %v213 = vshrl.u32 %v212, 7
    %v214 = vsub.s32 2, %v213
    %v215 = vrot.slane %v202, %v214
    %v216 = vlaneseq
    %v217 = vshrl.u32 %v216, 7
    %v218 = vsub.s32 3, %v217
    %v219 = vrot.slane %v202, %v218
    %v220 = vlaneseq
    %v221 = vshrl.u32 %v220, 7
    %v222 = vsub.s32 4, %v221
    %v223 = vrot.slane %v202, %v222
    %v224 = vlaneseq
    %v225 = vshrl.u32 %v224, 7
    %v226 = vsub.s32 5, %v225
    %v227 = vrot.slane %v202, %v226
    %v228 = vlaneseq
    %v229 = vshrl.u32 %v228, 7
    %v230 = vsub.s32 6, %v229
    %v231 = vrot.slane %v202, %v230
    %v232 = vlaneseq
    %v233 = vshrl.u32 %v232, 7
    %v234 = vsub.s32 7, %v233
    %v235 = vrot.slane %v202, %v234
    %vm244 = vcmask 1040384
    %v245 = vsel %vm244, %v207, -inf
    %v246 = vsel %vm244, %v211, -inf
    %v247 = vsel %vm244, %v215, -inf
    %v248 = vsel %vm244, %v219, -inf
    %v249 = vsel %vm244, %v223, -inf
    %v250 = vmax.f32 %v245, %v249
    %v251 = vsel %vm244, %v227, -inf
    %v252 = vmax.f32 %v246, %v251
    %v253 = vsel %vm244, %v231, -inf
    %v254 = vmax.f32 %v247, %v253
    %v255 = vsel %vm244, %v235, -inf
    %v256 = vmax.f32 %v248, %v255
    %v257 = vmax.f32 %v250, %v252
    %v258 = vmax.f32 %v254, %v256
    %v259 = vmax.f32 %v257, %v258
    %260 = vmax.xlane.f32.xlu0 %v259
    %v261 = vpop.xlane.xlu0 %260
    %v262 = vrot.slane %v261, 4
    %v263 = vmax.f32 %v261, %v262
    %v264 = vrot.slane %v263, 2
    %v265 = vmax.f32 %v263, %v264
    %v266 = vrot.slane %v265, 1
    %v267 = vmax.f32 %v265, %v266
    %s268 = vtos %v267
    %v269 = vstv %s268
    %270 = vst [vmem:[%s1] sm:$0xff] %v269
  $region13: #{quant_forward.2} parent=0 // pred_fallthru
    _
  // Predicated region
  $region14: #{quant_forward.2} parent=0 // pred_check
    _
  $region15: #{quant_forward.2} parent=0 // pred_check_branch
    %272 = sbr.rel (0) target = $region17
  $region16: #{quant_forward.2} parent=0 // pred_region
    _
  $region17: #{quant_forward.2} parent=0 // pred_fallthru
    _
  // Predicated region
  $region18: #{quant_forward.2} parent=0 // pred_check
    _
  $region19: #{quant_forward.2} parent=0 // pred_check_branch
    %274 = sbr.rel (0) target = $region21
  $region20: #{quant_forward.2} parent=0 // pred_region
    _
  $region21: #{quant_forward.2} parent=0 // pred_fallthru
    _

// kernel: quant_forward.3
$region0: #{quant_forward.3}
  #allocation0 [shape = 'u32[]', space=smem, size = 0x4, offset = 0x4, fixed_abs, tag = 'smem constant byte address 0x4 - core index']
  #allocation1 [shape = 'u32[144,128]{1,0:T(1,128)}', space=vmem, size = 0x12000, scoped, tag = 'internal scratch']
  %s0 = inlined_call_operand.vmem [shape: f32[3], index: 0, kind: input, shape index: {}]
  %s1 = inlined_call_operand.vmem [shape: f32[2,1024], index: 1, kind: input, shape index: {}]
  %s2 = inlined_call_operand.vmem [shape: f32[2,1024], index: 2, kind: output, shape index: {}]
  %s3 = sld [smem:[#allocation0]]
  $region22: #{quant_forward.3} parent=0
    _
  %s5 = ssub.s32 1, %s3
  %s6 = scalar_select 0, %s5, %s3
  $region1: #{quant_forward.3} parent=0
    #allocation2 [shape = 'u8[512]{0}', space=smem, size = 0x200, scoped, tag = 'input window, operand 0, single buffered']
    #allocation3 [shape = 's32[1]{0}', space=sflag, size = 0x4, scoped, tag = 'scoped memory for quant_forward.3']
    %7 = vsyncpa [#allocation3], 0
    // Predicated region
    $region2: #{quant_forward.3} parent=1 // pred_check
      _
    $region3: #{quant_forward.3} parent=1 // pred_check_branch
      %9 = sbr.rel (0) target = $region5
    $region4: #{quant_forward.3} parent=1 // pred_region
      %s11 = ssub.s32 16, 16
      %12 = vsyncadd [#allocation3], %s11
      %s14 = sshll.u32 %s0, 4
      %s15 = int_to_ptr.vmem [resolvable:$true] %s14
      %17 = dma.vmem_to_smem %s15, 16, [#allocation2], [#allocation3]
    $region5: #{quant_forward.3} parent=1 // pred_fallthru
      _
    // Predicated region
    $region6: #{quant_forward.3} parent=1 // pred_check
      _
    $region7: #{quant_forward.3} parent=1 // pred_check_branch
      %19 = sbr.rel (0) target = $region9
    $region8: #{quant_forward.3} parent=1 // pred_region
      _
    $region9: #{quant_forward.3} parent=1 // pred_fallthru
      _
    // Predicated region
    $region10: #{quant_forward.3} parent=1 // pred_check
      _
    $region11: #{quant_forward.3} parent=1 // pred_check_branch
      %21 = sbr.rel (0) target = $region13
    $region12: #{quant_forward.3} parent=1 // pred_region
      %22 = dma.done [#allocation3], 16
    $region13: #{quant_forward.3} parent=1 // pred_fallthru
      _
    %23 = sfence
    %s24 = sld [smem:[#allocation2]]
    %s25 = sld [smem:[#allocation2 + $0x1]]
    %s26 = sld [smem:[#allocation2 + $0x2]]
    %v27 = vld [vmem:[%s1] sm:$0xff]
    %v28 = vld [vmem:[%s1 + $0x8] sm:$0xff]
    %v29 = vstv %s25
    %v30 = vmul.f32 %v27, %v29
    %v31 = vmul.f32 %v28, %v29
    %v32 = vround.ne.pseudo %v30
    %v33 = vround.ne.pseudo %v31
    %v34 = vmax.f32 %v32, -127.0
    %v35 = vmax.f32 %v33, -127.0
    %v36 = vmin.f32 %v34, 127.0
    %v37 = vmin.f32 %v35, 127.0
    %v38 = vstv %s24
    %v39 = vmul.f32 %v36, %v38
    %v40 = vmul.f32 %v37, %v38
    %p41 = scmp.gt.f32.partialorder %s26, 0.0
    %s42 = scalar_select %p41, 1, 0
    %v43 = vstv %s42
    %vm44 = vcmp.eq.s32.totalorder %v43, 1
    %v45 = vsel %vm44, %v39, %v27
    %v46 = vsel %vm44, %v40, %v28
    %47 = vst [vmem:[%s2] sm:$0xff] %v45
    %48 = vst [vmem:[%s2 + $0x8] sm:$0xff] %v46
    // Predicated region
    $region14: #{quant_forward.3} parent=1 // pred_check
      _
    $region15: #{quant_forward.3} parent=1 // pred_check_branch
      %50 = sbr.rel (0) target = $region17
    $region16: #{quant_forward.3} parent=1 // pred_region
      _
    $region17: #{quant_forward.3} parent=1 // pred_fallthru
      _
    // Predicated region
    $region18: #{quant_forward.3} parent=1 // pred_check
      _
    $region19: #{quant_forward.3} parent=1 // pred_check_branch
      %52 = sbr.rel (0) target = $region21
    $region20: #{quant_forward.3} parent=1 // pred_region
      _
    $region21: #{quant_forward.3} parent=1 // pred_fallthru
      _
    %53 = vsyncpa [#allocation3], 1

</llo_original>
